<compile_context>
chip_gen: v5e
topology: v5e:2x2
jax: 0.10.0
libtpu: 0.0.40
codegen_flags: <defaults>
</compile_context>

<pallas_src>
import math

import jax
import jax.numpy as jnp
from jax.experimental import pallas as pl
from jax.experimental.pallas import tpu as pltpu

_SQRT_2_OVER_PI = math.sqrt(2.0 / math.pi)


def _gelu_tanh(h):
    # tanh-approximate GELU == GELU(approximate=True) in the reference module.
    h2 = h * h
    return 0.5 * h * (1.0 + jnp.tanh(_SQRT_2_OVER_PI * h * (1.0 + 0.044715 * h2)))


def _ffn_resident_kernel(x_ref, w1_ref, b1_ref, w2_ref, b2_ref, o_ref):
    """Whole hidden dim resident in VMEM: single pass, no accumulator."""
    h = jnp.dot(x_ref[...], w1_ref[...], preferred_element_type=jnp.float32)
    h = _gelu_tanh(h + b1_ref[...].astype(jnp.float32))
    # dropout -> identity (eval mode)
    out = jnp.dot(h.astype(w2_ref.dtype), w2_ref[...],
                  preferred_element_type=jnp.float32)
    o_ref[...] = (out + b2_ref[...].astype(jnp.float32)).astype(o_ref.dtype)


def _ffn_slab_direct_kernel(x_ref, w1_ref, b1_ref, w2_ref, b2_ref, o_ref):
    """Hidden dim slabbed; f32 output block doubles as the accumulator."""
    k = pl.program_id(1)

    @pl.when(k == 0)
    def _init():
        o_ref[...] = jnp.zeros_like(o_ref)

    h = jnp.dot(x_ref[...], w1_ref[...], preferred_element_type=jnp.float32)
    h = _gelu_tanh(h + b1_ref[...].astype(jnp.float32))
    o_ref[...] += jnp.dot(h.astype(w2_ref.dtype), w2_ref[...],
                          preferred_element_type=jnp.float32)

    @pl.when(k == pl.num_programs(1) - 1)
    def _finalize():
        o_ref[...] += b2_ref[...].astype(jnp.float32)


def _ffn_slab_acc_kernel(x_ref, w1_ref, b1_ref, w2_ref, b2_ref, o_ref, acc_ref):
    """Hidden dim slabbed; f32 VMEM scratch accumulator (non-f32 outputs)."""
    k = pl.program_id(1)

    @pl.when(k == 0)
    def _init():
        acc_ref[...] = jnp.zeros_like(acc_ref)

    h = jnp.dot(x_ref[...], w1_ref[...], preferred_element_type=jnp.float32)
    h = _gelu_tanh(h + b1_ref[...].astype(jnp.float32))
    acc_ref[...] += jnp.dot(h.astype(w2_ref.dtype), w2_ref[...],
                            preferred_element_type=jnp.float32)

    @pl.when(k == pl.num_programs(1) - 1)
    def _finalize():
        o_ref[...] = (acc_ref[...] + b2_ref[...].astype(jnp.float32)
                      ).astype(o_ref.dtype)


def _round_up(x, m):
    return ((x + m - 1) // m) * m


def _pad_cols(a, cols):
    return a if a.shape[1] == cols else jnp.pad(a, ((0, 0), (0, cols - a.shape[1])))


def _pad2(a, rows, cols):
    r, c = a.shape
    if (r, c) == (rows, cols):
        return a
    return jnp.pad(a, ((0, rows - r), (0, cols - c)))


def feedforward(x, w1, b1, w2, b2, *, tm=None, th_max=None, compute_dtype=None):
    """x: [B, N, D]; w1: [D, H] (mlp1.weight.T); b1: [H]; w2: [H, D] (mlp2.weight.T); b2: [D]."""
    B, N, D = x.shape
    H = w1.shape[1]
    M = B * N

    out_dtype = x.dtype
    cdt = jnp.dtype(compute_dtype) if compute_dtype is not None else jnp.dtype(x.dtype)
    cb = cdt.itemsize
    ob = jnp.dtype(out_dtype).itemsize
    bias_b = jnp.dtype(b1.dtype).itemsize

    # Lane-dense (multiple-of-128) feature dims.
    Dp = _round_up(D, 128)
    Hp = _round_up(H, 128)

    # Per-TensorCore VMEM capacity.
    try:
        vmem_cap = int(pltpu.get_tpu_info().vmem_capacity_bytes)
    except Exception:
        vmem_cap = 64 * 1024 * 1024                  # conservative (v7x per-TC)
    budget = int(0.80 * vmem_cap)
    small_vmem = vmem_cap <= 96 * 1024 * 1024        # v7x-like: 64 MiB/TC, 2 TCs

    # Row tile: large on 128-MiB parts (fewer weight restreams / less step
    # overhead), moderate on 64-MiB parts, where we also keep >= 2 row tiles so
    # both TensorCores are used ("parallel" row axis is megacore-sharded).
    if tm is None:
        tm = 512 if small_vmem else 1024
        if small_vmem and M > 256:
            tm = min(tm, _round_up((M + 1) // 2, 8))
    tm = max(1, min(int(tm), M))
    if tm < M:
        tm = _round_up(tm, 8)                        # sublane-aligned unless full-extent
    gm = (M + tm - 1) // tm

    def vmem_bytes(th_, with_acc):
        return (2 * Dp * th_ * cb * 2                # W1 + W2 blocks, double-buffered
                + (th_ + Dp) * bias_b * 8 * 2        # bias blocks (sublane padded)
                + tm * Dp * cb * 2                   # x tile, double-buffered
                + tm * Dp * ob * 2                   # out tile, double-buffered
                + (tm * Dp * 4 if with_acc else 0)   # f32 accumulator scratch
                + 4 * tm * th_ * 4)                  # f32 hidden + ~3 GELU temporaries

    # Weight-resident whenever the full hidden slab fits the VMEM budget.
    resident = ((th_max is None or int(th_max) >= Hp)
                and vmem_bytes(Hp, with_acc=False) <= budget)

    if resident:
        th, gk, with_acc = Hp, 1, False
    else:
        with_acc = out_dtype != jnp.float32          # f32 outputs accumulate in place
        cap = Hp if th_max is None else min(Hp, int(th_max))
        th = max(128, (cap // 128) * 128)
        while th > 128 and vmem_bytes(th, with_acc) > budget:
            th -= 128
        while Hp % th != 0:                          # keep the hidden padding a no-op
            th -= 128
        gk = Hp // th

    # Operands in compute dtype (bf16 opt-in -> MXU-native, half the weight DMA);
    # accumulation stays f32 via preferred_element_type.
    x2 = x.reshape(M, D).astype(cdt)
    w1c = w1.astype(cdt)
    w2c = w2.astype(cdt)

    # Zero-pad feature dims only; no row padding (cdiv grid + masked edge block).
    xp = _pad_cols(x2, Dp)
    w1p = _pad2(w1c, Dp, Hp)
    w2p = _pad2(w2c, Hp, Dp)
    b1p = _pad_cols(b1.reshape(1, H), Hp)
    b2p = _pad_cols(b2.reshape(1, D), Dp)

    est = vmem_bytes(th, with_acc)
    vmem_limit = int(min(max(1.25 * est + (8 << 20), 32 << 20), 0.92 * vmem_cap))

    cost = pl.CostEstimate(
        flops=int(4 * M * D * H),
        transcendentals=int(M * H),
        bytes_accessed=int(M * D * (cb + ob)
                           + 2 * D * H * cb * (1 if resident else gm)
                           + (D + H) * bias_b),
    )

    if resident:
        call = pl.pallas_call(
            _ffn_resident_kernel,
            out_shape=jax.ShapeDtypeStruct((M, Dp), out_dtype),
            grid=(gm,),
            in_specs=[
                pl.BlockSpec((tm, Dp), lambda i: (i, 0)),      # x rows
                pl.BlockSpec((Dp, Hp), lambda i: (0, 0)),      # W1 (resident)
                pl.BlockSpec((1, Hp), lambda i: (0, 0)),       # b1 (resident)
                pl.BlockSpec((Hp, Dp), lambda i: (0, 0)),      # W2 (resident)
                pl.BlockSpec((1, Dp), lambda i: (0, 0)),       # b2 (resident)
            ],
            out_specs=pl.BlockSpec((tm, Dp), lambda i: (i, 0)),
            compiler_params=pltpu.CompilerParams(
                dimension_semantics=("parallel",),
                vmem_limit_bytes=vmem_limit),
            cost_estimate=cost,
        )
    else:
        kernel = _ffn_slab_acc_kernel if with_acc else _ffn_slab_direct_kernel
        scratch = [pltpu.VMEM((tm, Dp), jnp.float32)] if with_acc else []
        call = pl.pallas_call(
            kernel,
            out_shape=jax.ShapeDtypeStruct((M, Dp), out_dtype),
            grid=(gm, gk),
            in_specs=[
                pl.BlockSpec((tm, Dp), lambda i, k: (i, 0)),   # x rows (no re-DMA over k)
                pl.BlockSpec((Dp, th), lambda i, k: (0, k)),   # W1 slab
                pl.BlockSpec((1, th), lambda i, k: (0, k)),    # b1 slab
                pl.BlockSpec((th, Dp), lambda i, k: (k, 0)),   # W2 slab
                pl.BlockSpec((1, Dp), lambda i, k: (0, 0)),    # b2 (constant)
            ],
            out_specs=pl.BlockSpec((tm, Dp), lambda i, k: (i, 0)),
            scratch_shapes=scratch,
            compiler_params=pltpu.CompilerParams(
                dimension_semantics=("parallel", "arbitrary"),
                vmem_limit_bytes=vmem_limit),
            cost_estimate=cost,
        )

    out = call(xp, w1p, b1p, w2p, b2p)
    if Dp != D:
        out = out[:, :D]
    return out.reshape(B, N, D)


def _reference(x, w1, b1, w2, b2):
    h = jnp.einsum("bnd,dh->bnh", x, w1) + b1
    c = math.sqrt(2.0 / math.pi)
    h = h * (0.5 * (1.0 + jnp.tanh(c * (h + 0.044715 * h ** 3))))
    return jnp.einsum("bnh,hd->bnd", h, w2) + b2


def _make_params(key, B, N, D, H):
    kx, kw1, kb1, kw2, kb2 = jax.random.split(key, 5)
    lim1, lim2 = 1.0 / math.sqrt(D), 1.0 / math.sqrt(H)
    x = jax.random.normal(kx, (B, N, D), dtype=jnp.float32)
    w1 = jax.random.uniform(kw1, (D, H), jnp.float32, -lim1, lim1)   # mlp1.weight.T
    b1 = jax.random.uniform(kb1, (H,), jnp.float32, -lim1, lim1)     # mlp1.bias
    w2 = jax.random.uniform(kw2, (H, D), jnp.float32, -lim2, lim2)   # mlp2.weight.T
    b2 = jax.random.uniform(kb2, (D,), jnp.float32, -lim2, lim2)     # mlp2.bias
    return x, w1, b1, w2, b2


if __name__ == "__main__":
    # Case 1: tiny ViT-like shapes; weight-resident single-pass path (gk == 1).
    B, N, D, H = 2, 8, 32, 64
    x, w1, b1, w2, b2 = _make_params(jax.random.PRNGKey(0), B, N, D, H)
    out = jax.block_until_ready(feedforward(x, w1, b1, w2, b2))
    ref = _reference(x, w1, b1, w2, b2)
    assert out.shape == (B, N, D)
    assert jnp.allclose(out, ref, atol=1e-5, rtol=1e-5), "case1 mismatch vs reference"

    # Case 2: forced hidden-dim slabbing (gk > 1), f32 direct output accumulation,
    # column padding of x, and a partial edge row block (M=80, tm=32).
    B, N, D, H = 2, 40, 48, 320
    x, w1, b1, w2, b2 = _make_params(jax.random.PRNGKey(1), B, N, D, H)
    out = jax.block_until_ready(feedforward(x, w1, b1, w2, b2, tm=32, th_max=128))
    ref = _reference(x, w1, b1, w2, b2)
    assert out.shape == (B, N, D)
    assert jnp.allclose(out, ref, atol=1e-4, rtol=1e-4), "case2 mismatch vs reference"

    # Case 3: bf16 input (bf16 output) + forced slabbing -> scratch-accumulator path.
    B, N, D, H = 2, 24, 64, 192
    x, w1, b1, w2, b2 = _make_params(jax.random.PRNGKey(2), B, N, D, H)
    out = jax.block_until_ready(
        feedforward(x.astype(jnp.bfloat16), w1, b1, w2, b2, th_max=128))
    ref = _reference(x, w1, b1, w2, b2)
    assert out.shape == (B, N, D) and out.dtype == jnp.bfloat16
    assert jnp.allclose(out.astype(jnp.float32), ref, atol=5e-2, rtol=5e-2), \
        "case3 mismatch vs reference"

    # Case 4: weight-resident path with >1 row tile and a masked edge row block
    # (M=200, tm=128); no feature padding at all. Tight f32 tolerance.
    B, N, D, H = 2, 100, 128, 256
    x, w1, b1, w2, b2 = _make_params(jax.random.PRNGKey(3), B, N, D, H)
    out = jax.block_until_ready(feedforward(x, w1, b1, w2, b2, tm=128))
    ref = _reference(x, w1, b1, w2, b2)
    assert out.shape == (B, N, D)
    assert jnp.allclose(out, ref, atol=1e-4, rtol=1e-4), "case4 mismatch vs reference"

    # Case 5: explicit bf16 compute opt-in on f32 inputs (resident path).
    B, N, D, H = 2, 8, 32, 64
    x, w1, b1, w2, b2 = _make_params(jax.random.PRNGKey(4), B, N, D, H)
    out = jax.block_until_ready(
        feedforward(x, w1, b1, w2, b2, compute_dtype=jnp.bfloat16))
    ref = _reference(x, w1, b1, w2, b2)
    assert out.shape == (B, N, D) and out.dtype == jnp.float32
    assert jnp.allclose(out, ref, atol=5e-2, rtol=5e-2), "case5 mismatch vs reference"

    print("KERNEL_OK")
</pallas_src>

<mosaic_0001>
module attributes {stable_mosaic.version = 11 : i64} {
  func.func @_ffn_resident_kernel(%arg0: i32, %arg1: memref<16x128xf32, #tpu.memory_space<vmem>>, %arg2: memref<128x128xf32, #tpu.memory_space<vmem>>, %arg3: memref<1x128xf32, #tpu.memory_space<vmem>>, %arg4: memref<128x128xf32, #tpu.memory_space<vmem>>, %arg5: memref<1x128xf32, #tpu.memory_space<vmem>>, %arg6: memref<16x128xf32, #tpu.memory_space<vmem>>) attributes {dimension_semantics = [#tpu.dimension_semantics<parallel>], iteration_bounds = array<i64: 1>, scalar_prefetch = 0 : i64, scratch_operands = 0 : i64, tpu.core_type = #tpu.core_type<tc>, window_params = [{transform_indices = @transform_0, window_bounds = array<i64: 16, 128>}, {pipeline_mode = #tpu.pipeline_mode<synchronous>, transform_indices = @transform_1, window_bounds = array<i64: 128, 128>}, {pipeline_mode = #tpu.pipeline_mode<synchronous>, transform_indices = @transform_2, window_bounds = array<i64: 1, 128>}, {pipeline_mode = #tpu.pipeline_mode<synchronous>, transform_indices = @transform_3, window_bounds = array<i64: 128, 128>}, {pipeline_mode = #tpu.pipeline_mode<synchronous>, transform_indices = @transform_4, window_bounds = array<i64: 1, 128>}, {transform_indices = @transform_5, window_bounds = array<i64: 16, 128>}]} {
    %c0 = arith.constant 0 : index
    %c0_0 = arith.constant 0 : index
    %0 = vector.load %arg1[%c0, %c0_0] : memref<16x128xf32, #tpu.memory_space<vmem>>, vector<16x128xf32>
    %c0_1 = arith.constant 0 : index
    %c0_2 = arith.constant 0 : index
    %1 = vector.load %arg2[%c0_1, %c0_2] : memref<128x128xf32, #tpu.memory_space<vmem>>, vector<128x128xf32>
    %cst = arith.constant dense<0.000000e+00> : vector<16x128xf32>
    %2 = tpu.matmul %0, %1, %cst {dimension_numbers = #tpu.dot_dimension_numbers<[1], [0], [0], [1], [0, 0, 1, 1], [], []>} : vector<16x128xf32>, vector<128x128xf32>, vector<16x128xf32> -> vector<16x128xf32>
    %c0_3 = arith.constant 0 : index
    %c0_4 = arith.constant 0 : index
    %3 = vector.load %arg3[%c0_3, %c0_4] : memref<1x128xf32, #tpu.memory_space<vmem>>, vector<1x128xf32>
    %4 = vector.broadcast %3 : vector<1x128xf32> to vector<16x128xf32>
    %5 = arith.addf %2, %4 : vector<16x128xf32>
    %6 = arith.mulf %5, %5 : vector<16x128xf32>
    %cst_5 = arith.constant 5.000000e-01 : f32
    %7 = vector.broadcast %cst_5 : f32 to vector<16x128xf32>
    %8 = arith.mulf %7, %5 : vector<16x128xf32>
    %cst_6 = arith.constant 0.797884583 : f32
    %9 = vector.broadcast %cst_6 : f32 to vector<16x128xf32>
    %10 = arith.mulf %9, %5 : vector<16x128xf32>
    %cst_7 = arith.constant 4.471500e-02 : f32
    %11 = vector.broadcast %cst_7 : f32 to vector<16x128xf32>
    %12 = arith.mulf %11, %6 : vector<16x128xf32>
    %cst_8 = arith.constant 1.000000e+00 : f32
    %13 = vector.broadcast %cst_8 : f32 to vector<16x128xf32>
    %14 = arith.addf %13, %12 : vector<16x128xf32>
    %15 = arith.mulf %10, %14 : vector<16x128xf32>
    %16 = math.tanh %15 : vector<16x128xf32>
    %cst_9 = arith.constant 1.000000e+00 : f32
    %17 = vector.broadcast %cst_9 : f32 to vector<16x128xf32>
    %18 = arith.addf %17, %16 : vector<16x128xf32>
    %19 = arith.mulf %8, %18 : vector<16x128xf32>
    %c0_10 = arith.constant 0 : index
    %c0_11 = arith.constant 0 : index
    %20 = vector.load %arg4[%c0_10, %c0_11] : memref<128x128xf32, #tpu.memory_space<vmem>>, vector<128x128xf32>
    %cst_12 = arith.constant dense<0.000000e+00> : vector<16x128xf32>
    %21 = tpu.matmul %19, %20, %cst_12 {dimension_numbers = #tpu.dot_dimension_numbers<[1], [0], [0], [1], [0, 0, 1, 1], [], []>} : vector<16x128xf32>, vector<128x128xf32>, vector<16x128xf32> -> vector<16x128xf32>
    %c0_13 = arith.constant 0 : index
    %c0_14 = arith.constant 0 : index
    %22 = vector.load %arg5[%c0_13, %c0_14] : memref<1x128xf32, #tpu.memory_space<vmem>>, vector<1x128xf32>
    %23 = vector.broadcast %22 : vector<1x128xf32> to vector<16x128xf32>
    %24 = arith.addf %21, %23 : vector<16x128xf32>
    %c0_15 = arith.constant 0 : index
    %c0_16 = arith.constant 0 : index
    %25 = vector.load %arg6[%c0_15, %c0_16] : memref<16x128xf32, #tpu.memory_space<vmem>>, vector<16x128xf32>
    tpu.vector_store %arg6[%c0_15, %c0_16], %24 {strides = array<i32>} : memref<16x128xf32, #tpu.memory_space<vmem>>, vector<16x128xf32>,
    return
  }
  func.func @transform_0(%arg0: i32) -> (i32, i32) {
    %c0_i32 = arith.constant 0 : i32
    %c0_i32_0 = arith.constant 0 : i32
    return %arg0, %c0_i32 : i32, i32
  }
  func.func @transform_1(%arg0: i32) -> (i32, i32) {
    %c0_i32 = arith.constant 0 : i32
    %c0_i32_0 = arith.constant 0 : i32
    %c0_i32_1 = arith.constant 0 : i32
    return %c0_i32, %c0_i32_0 : i32, i32
  }
  func.func @transform_2(%arg0: i32) -> (i32, i32) {
    %c0_i32 = arith.constant 0 : i32
    %c0_i32_0 = arith.constant 0 : i32
    %c0_i32_1 = arith.constant 0 : i32
    return %c0_i32, %c0_i32_0 : i32, i32
  }
  func.func @transform_3(%arg0: i32) -> (i32, i32) {
    %c0_i32 = arith.constant 0 : i32
    %c0_i32_0 = arith.constant 0 : i32
    %c0_i32_1 = arith.constant 0 : i32
    return %c0_i32, %c0_i32_0 : i32, i32
  }
  func.func @transform_4(%arg0: i32) -> (i32, i32) {
    %c0_i32 = arith.constant 0 : i32
    %c0_i32_0 = arith.constant 0 : i32
    %c0_i32_1 = arith.constant 0 : i32
    return %c0_i32, %c0_i32_0 : i32, i32
  }
  func.func @transform_5(%arg0: i32) -> (i32, i32) {
    %c0_i32 = arith.constant 0 : i32
    %c0_i32_0 = arith.constant 0 : i32
    return %arg0, %c0_i32 : i32, i32
  }
}

</mosaic_0001>

<llo_original>
// kernel: tpu_custom_call.1
$region0: #{tpu_custom_call.1}
  #allocation0 [shape = 'u32[]', space=smem, size = 0x4, offset = 0x4, fixed_abs, tag = 'smem constant byte address 0x4 - core index']
  #allocation1 [shape = 'u32[72,128]{1,0:T(1,128)}', space=vmem, size = 0x9000, scoped, tag = 'internal scratch']
  %s0 = inlined_call_operand.hbm [shape: f32[16,128], index: 0, kind: input, shape index: {}]
  %s1 = inlined_call_operand.hbm [shape: f32[128,128], index: 1, kind: input, shape index: {}]
  %s2 = inlined_call_operand.vmem [shape: f32[1,128], index: 2, kind: input, shape index: {}]
  %s3 = inlined_call_operand.hbm [shape: f32[128,128], index: 3, kind: input, shape index: {}]
  %s4 = inlined_call_operand.vmem [shape: f32[1,128], index: 4, kind: input, shape index: {}]
  %s5 = inlined_call_operand.hbm [shape: f32[16,128], index: 5, kind: output, shape index: {}]
  %s6 = sld [smem:[#allocation0]]
  $region42: #{tpu_custom_call.1} parent=0
    _
  %s8 = ssub.s32 1, %s6
  %s9 = scalar_select 0, %s8, %s6
  $region1: #{tpu_custom_call.1} parent=0
    #allocation2 [shape = 'u8[8192]{0}', space=vmem, size = 0x2000, scoped, tag = 'input window, operand 0, single buffered']
    #allocation3 [shape = 's32[1]{0}', space=sflag, size = 0x4, scoped, tag = 'scoped memory for tpu_custom_call.1']
    #allocation4 [shape = 's32[1]{0}', space=sflag, size = 0x4, scoped, tag = 'scoped memory for tpu_custom_call.1']
    #allocation5 [shape = 'u8[65536]{0}', space=vmem, size = 0x10000, scoped, tag = 'input window, operand 1, single buffered']
    #allocation6 [shape = 's32[1]{0}', space=sflag, size = 0x4, scoped, tag = 'scoped memory for tpu_custom_call.1']
    #allocation7 [shape = 'u8[65536]{0}', space=vmem, size = 0x10000, scoped, tag = 'input window, operand 3, single buffered']
    #allocation8 [shape = 'u8[8192]{0}', space=vmem, size = 0x2000, scoped, tag = 'output window, operand 0, single buffered']
    %10 = vsyncpa [#allocation3], 0
    %11 = vsyncpa [#allocation6], 0
    %12 = vsyncpa [#allocation4], 0
    // Predicated region
    $region2: #{tpu_custom_call.1} parent=1 // pred_check
      _
    $region3: #{tpu_custom_call.1} parent=1 // pred_check_branch
      %14 = sbr.rel (0) target = $region5
    $region4: #{tpu_custom_call.1} parent=1 // pred_region
      %16 = vsyncadd [#allocation3], 0
      %s17 = sshll.u32 %s0, 4
      %s18 = int_to_ptr.hbm [resolvable:$true] %s17
      %s19 = sshll.u32 [#allocation2], 4
      %s20 = int_to_ptr.vmem [resolvable:$true] %s19
      %25 = dma.hbm_to_vmem [thread:$0]  %s18, 256, %s20, [#allocation3], 128, 128, 8
    $region5: #{tpu_custom_call.1} parent=1 // pred_fallthru
      _
    // Predicated region
    $region6: #{tpu_custom_call.1} parent=1 // pred_check
      _
    $region7: #{tpu_custom_call.1} parent=1 // pred_check_branch
      %27 = sbr.rel (0) target = $region9
    $region8: #{tpu_custom_call.1} parent=1 // pred_region
      %29 = vsyncadd [#allocation6], 0
      %s30 = sshll.u32 %s1, 4
      %s31 = int_to_ptr.hbm [resolvable:$true] %s30
      %s32 = sshll.u32 [#allocation5], 4
      %s33 = int_to_ptr.vmem [resolvable:$true] %s32
      %38 = dma.hbm_to_vmem [thread:$0]  %s31, 2048, %s33, [#allocation6], 128, 128, 8
    $region9: #{tpu_custom_call.1} parent=1 // pred_fallthru
      _
    // Predicated region
    $region10: #{tpu_custom_call.1} parent=1 // pred_check
      _
    $region11: #{tpu_custom_call.1} parent=1 // pred_check_branch
      %40 = sbr.rel (0) target = $region13
    $region12: #{tpu_custom_call.1} parent=1 // pred_region
      _
    $region13: #{tpu_custom_call.1} parent=1 // pred_fallthru
      _
    // Predicated region
    $region14: #{tpu_custom_call.1} parent=1 // pred_check
      _
    $region15: #{tpu_custom_call.1} parent=1 // pred_check_branch
      %42 = sbr.rel (0) target = $region17
    $region16: #{tpu_custom_call.1} parent=1 // pred_region
      %44 = vsyncadd [#allocation6], 0
      %s45 = sshll.u32 %s3, 4
      %s46 = int_to_ptr.hbm [resolvable:$true] %s45
      %s47 = sshll.u32 [#allocation7], 4
      %s48 = int_to_ptr.vmem [resolvable:$true] %s47
      %53 = dma.hbm_to_vmem [thread:$0]  %s46, 2048, %s48, [#allocation6], 128, 128, 8
    $region17: #{tpu_custom_call.1} parent=1 // pred_fallthru
      _
    // Predicated region
    $region18: #{tpu_custom_call.1} parent=1 // pred_check
      _
    $region19: #{tpu_custom_call.1} parent=1 // pred_check_branch
      %55 = sbr.rel (0) target = $region21
    $region20: #{tpu_custom_call.1} parent=1 // pred_region
      _
    $region21: #{tpu_custom_call.1} parent=1 // pred_fallthru
      _
    // Predicated region
    $region22: #{tpu_custom_call.1} parent=1 // pred_check
      _
    $region23: #{tpu_custom_call.1} parent=1 // pred_check_branch
      %57 = sbr.rel (0) target = $region25
    $region24: #{tpu_custom_call.1} parent=1 // pred_region
      %59 = dma.done [#allocation3], 256
    $region25: #{tpu_custom_call.1} parent=1 // pred_fallthru
      _
    // Predicated region
    $region26: #{tpu_custom_call.1} parent=1 // pred_check
      _
    $region27: #{tpu_custom_call.1} parent=1 // pred_check_branch
      %61 = sbr.rel (0) target = $region29
    $region28: #{tpu_custom_call.1} parent=1 // pred_region
      %63 = dma.done [#allocation6], 2048
    $region29: #{tpu_custom_call.1} parent=1 // pred_fallthru
      _
    // Predicated region
    $region30: #{tpu_custom_call.1} parent=1 // pred_check
      _
    $region31: #{tpu_custom_call.1} parent=1 // pred_check_branch
      %65 = sbr.rel (0) target = $region33
    $region32: #{tpu_custom_call.1} parent=1 // pred_region
      %67 = dma.done [#allocation6], 2048
    $region33: #{tpu_custom_call.1} parent=1 // pred_fallthru
      _
    %v68 = vld [vmem:[#allocation2] sm:$0xff]
    %v69 = vld [vmem:[#allocation2 + $0x8] sm:$0xff]
    %v70 = vld [vmem:[#allocation5] sm:$0xff]
    %v71 = vld [vmem:[#allocation5 + $0x8] sm:$0xff]
    %v72 = vld [vmem:[#allocation5 + $0x10] sm:$0xff]
    %v73 = vld [vmem:[#allocation5 + $0x18] sm:$0xff]
    %v74 = vld [vmem:[#allocation5 + $0x20] sm:$0xff]
    %v75 = vld [vmem:[#allocation5 + $0x28] sm:$0xff]
    %v76 = vld [vmem:[#allocation5 + $0x30] sm:$0xff]
    %v77 = vld [vmem:[#allocation5 + $0x38] sm:$0xff]
    %v78 = vld [vmem:[#allocation5 + $0x40] sm:$0xff]
    %v79 = vld [vmem:[#allocation5 + $0x48] sm:$0xff]
    %v80 = vld [vmem:[#allocation5 + $0x50] sm:$0xff]
    %v81 = vld [vmem:[#allocation5 + $0x58] sm:$0xff]
    %v82 = vld [vmem:[#allocation5 + $0x60] sm:$0xff]
    %v83 = vld [vmem:[#allocation5 + $0x68] sm:$0xff]
    %v84 = vld [vmem:[#allocation5 + $0x70] sm:$0xff]
    %v85 = vld [vmem:[#allocation5 + $0x78] sm:$0xff]
    %v86 = vld [vmem:[%s2] sm:$0x1]
    %v88 = vperm.slane %v86, 0
    %90 = vmatpush.msra.mxu0 %v85
    %91 = vmatpush.msra.mxu0 %v84
    %92 = vmatpush.msra.mxu0 %v83
    %93 = vmatpush.msra.mxu0 %v82
    %94 = vmatpush.msra.mxu0 %v81
    %95 = vmatpush.msra.mxu0 %v80
    %96 = vmatpush.msra.mxu0 %v79
    %97 = vmatpush.msra.mxu0 %v78
    %98 = vmatpush.msra.mxu0 %v77
    %99 = vmatpush.msra.mxu0 %v76
    %100 = vmatpush.msra.mxu0 %v75
    %101 = vmatpush.msra.mxu0 %v74
    %102 = vmatpush.msra.mxu0 %v73
    %103 = vmatpush.msra.mxu0 %v72
    %104 = vmatpush.msra.mxu0 %v71
    %105 = vmatpush.msra.mxu0 %v70
    %106 = vmatmul.f32.gmra.mxu0 %v68
    %v107 = vpop.f32.mrf.mxu0
    %v108 = vadd.f32 %v88, %v107
    %109 = vmatmul.f32.gmra.mxu0 %v69
    %v110 = vpop.f32.mrf.mxu0
    %v111 = vadd.f32 %v88, %v110
    %112 = vdwg.mxu0
    %v113 = vmul.f32 %v108, %v108
    %v114 = vmul.f32 %v111, %v111
    %v115 = vmul.f32 %v108, 0.5
    %v116 = vmul.f32 %v111, 0.5
    %v117 = vmul.f32 %v108, 0.7978846
    %v118 = vmul.f32 %v111, 0.7978846
    %v119 = vmul.f32 %v113, 0.044715
    %v120 = vmul.f32 %v114, 0.044715
    %v121 = vadd.f32 %v119, 1.0
    %v122 = vadd.f32 %v120, 1.0
    %v123 = vmul.f32 %v117, %v121
    %v124 = vmul.f32 %v118, %v122
    %v125 = vtanh.pop %v123
    %v126 = vtanh.pop %v124
    %v127 = vadd.f32 %v125, 1.0
    %v128 = vadd.f32 %v126, 1.0
    %v129 = vmul.f32 %v115, %v127
    %v130 = vmul.f32 %v116, %v128
    %v131 = vld [vmem:[#allocation7] sm:$0xff]
    %v132 = vld [vmem:[#allocation7 + $0x8] sm:$0xff]
    %v133 = vld [vmem:[#allocation7 + $0x10] sm:$0xff]
    %v134 = vld [vmem:[#allocation7 + $0x18] sm:$0xff]
    %v135 = vld [vmem:[#allocation7 + $0x20] sm:$0xff]
    %v136 = vld [vmem:[#allocation7 + $0x28] sm:$0xff]
    %v137 = vld [vmem:[#allocation7 + $0x30] sm:$0xff]
    %v138 = vld [vmem:[#allocation7 + $0x38] sm:$0xff]
    %v139 = vld [vmem:[#allocation7 + $0x40] sm:$0xff]
    %v140 = vld [vmem:[#allocation7 + $0x48] sm:$0xff]
    %v141 = vld [vmem:[#allocation7 + $0x50] sm:$0xff]
    %v142 = vld [vmem:[#allocation7 + $0x58] sm:$0xff]
    %v143 = vld [vmem:[#allocation7 + $0x60] sm:$0xff]
    %v144 = vld [vmem:[#allocation7 + $0x68] sm:$0xff]
    %v145 = vld [vmem:[#allocation7 + $0x70] sm:$0xff]
    %v146 = vld [vmem:[#allocation7 + $0x78] sm:$0xff]
    %v147 = vld [vmem:[%s4] sm:$0x1]
    %v149 = vperm.slane %v147, 0
    %151 = vmatpush.msra.mxu0 %v146
    %152 = vmatpush.msra.mxu0 %v145
    %153 = vmatpush.msra.mxu0 %v144
    %154 = vmatpush.msra.mxu0 %v143
    %155 = vmatpush.msra.mxu0 %v142
    %156 = vmatpush.msra.mxu0 %v141
    %157 = vmatpush.msra.mxu0 %v140
    %158 = vmatpush.msra.mxu0 %v139
    %159 = vmatpush.msra.mxu0 %v138
    %160 = vmatpush.msra.mxu0 %v137
    %161 = vmatpush.msra.mxu0 %v136
    %162 = vmatpush.msra.mxu0 %v135
    %163 = vmatpush.msra.mxu0 %v134
    %164 = vmatpush.msra.mxu0 %v133
    %165 = vmatpush.msra.mxu0 %v132
    %166 = vmatpush.msra.mxu0 %v131
    %167 = vmatmul.f32.gmra.mxu0 %v129
    %v168 = vpop.f32.mrf.mxu0
    %v169 = vadd.f32 %v149, %v168
    %170 = vmatmul.f32.gmra.mxu0 %v130
    %v171 = vpop.f32.mrf.mxu0
    %v172 = vadd.f32 %v149, %v171
    %173 = vdwg.mxu0
    %174 = vst [vmem:[#allocation8] sm:$0xff] %v169
    %175 = vst [vmem:[#allocation8 + $0x8] sm:$0xff] %v172
    // Predicated region
    $region34: #{tpu_custom_call.1} parent=1 // pred_check
      _
    $region35: #{tpu_custom_call.1} parent=1 // pred_check_branch
      %177 = sbr.rel (0) target = $region37
    $region36: #{tpu_custom_call.1} parent=1 // pred_region
      %179 = vsyncadd [#allocation4], 0
      %s180 = sshll.u32 [#allocation8], 4
      %s181 = int_to_ptr.vmem [resolvable:$true] %s180
      %s182 = sshll.u32 %s5, 4
      %s183 = int_to_ptr.hbm [resolvable:$true] %s182
      %188 = dma.vmem_to_hbm [thread:$0]  %s181, 256, %s183, [#allocation4], 128, 128, 8
    $region37: #{tpu_custom_call.1} parent=1 // pred_fallthru
      _
    // Predicated region
    $region38: #{tpu_custom_call.1} parent=1 // pred_check
      _
    $region39: #{tpu_custom_call.1} parent=1 // pred_check_branch
      %190 = sbr.rel (0) target = $region41
    $region40: #{tpu_custom_call.1} parent=1 // pred_region
      %192 = dma.done [#allocation4], 256
    $region41: #{tpu_custom_call.1} parent=1 // pred_fallthru
      _
    %193 = vsyncpa [#allocation3], 1
    %194 = vsyncpa [#allocation6], 1
    %195 = vsyncpa [#allocation4], 1

</llo_original>
